<compile_context>
chip_gen: v5e
topology: v5e:2x2
jax: 0.10.0
libtpu: 0.0.40
codegen_flags: <defaults>
</compile_context>

<pallas_src>
import functools

import jax
import jax.numpy as jnp
from jax.experimental import pallas as pl
from jax.experimental.pallas import tpu as pltpu


def _triplet_tile_kernel(xk_ref, xa_ref, sqa_ref, labk_ref, laba_ref, kv_ref,
                         ap_ref, an_ref, per_ref,
                         ap_acc, an_acc,
                         *, margin):
    j = pl.program_id(1)

    @pl.when(j == 0)
    def _init():
        ap_acc[...] = jnp.full(ap_acc.shape, -jnp.inf, ap_acc.dtype)
        an_acc[...] = jnp.full(an_acc.shape, jnp.inf, an_acc.dtype)

    xk = xk_ref[...]                                            # (TN, D) keys

    # Gram tile on the MXU: A @ B^T form (contract last dims of both), f32
    # accumulation regardless of input dtype. No transposed operand in HBM.
    gram = jax.lax.dot_general(
        xk, xa_ref[...],
        dimension_numbers=(((1,), (1,)), ((), ())),
        preferred_element_type=jnp.float32)                     # (TN, TM)

    # Key squared norms from the already-resident tile (O(TN*D), hides under
    # the MXU).
    xkf = xk.astype(jnp.float32)
    sqk = jnp.sum(xkf * xkf, axis=-1, keepdims=True)            # (TN, 1)

    # Mining surrogate: dist^2 = 2*t + ||a||^2 with t = 0.5*||k||^2 - <k,a>.
    # ||a||^2 is constant per anchor column, so argmax/argmin over keys are
    # unchanged; the broadcast add and the *2 scale are hoisted to finalize.
    t = 0.5 * sqk - gram                                        # (TN, TM)

    is_pos = labk_ref[...] == laba_ref[...]                     # (TN, TM)
    valid = kv_ref[...] != 0                                    # (TN, 1)

    # Padded keys must never win: excluded from the positive max, +inf in the
    # negative min.
    ap_cand = jnp.where(jnp.logical_and(is_pos, valid), t, -jnp.inf)
    an_cand = jnp.where(jnp.logical_or(is_pos, jnp.logical_not(valid)),
                        jnp.inf, t)

    ap_acc[...] = jnp.maximum(ap_acc[...],
                              jnp.max(ap_cand, axis=0, keepdims=True))
    an_acc[...] = jnp.minimum(an_acc[...],
                              jnp.min(an_cand, axis=0, keepdims=True))

    @pl.when(j == pl.num_programs(1) - 1)
    def _finalize():
        sqa = sqa_ref[...]                                      # (1, TM)
        # clamp + sqrt only on the (1, TM) results; monotone-equivalent to the
        # reference's elementwise dist.clamp(min=1e-12).sqrt() before mining.
        dist_ap = jnp.sqrt(jnp.maximum(2.0 * ap_acc[...] + sqa, 1e-12))
        dist_an = jnp.sqrt(jnp.maximum(2.0 * an_acc[...] + sqa, 1e-12))
        ap_ref[...] = dist_ap
        an_ref[...] = dist_an
        if margin is not None:
            # nn.MarginRankingLoss(margin)(dist_an, dist_ap, y=1)
            per = jnp.maximum(dist_ap - dist_an + jnp.float32(margin), 0.0)
        else:
            # nn.SoftMarginLoss()(dist_an - dist_ap, y=1): stable softplus
            z = dist_ap - dist_an
            per = jnp.maximum(z, 0.0) + jnp.log1p(jnp.exp(-jnp.abs(z)))
        per_ref[...] = per


def _round_up(x, m):
    return ((x + m - 1) // m) * m


def _sublane_granule(dtype):
    # 8 for 32-bit, 16 for 16-bit, 32 for 8-bit packed sublane layouts.
    return max(8, 256 // (jnp.dtype(dtype).itemsize * 8))


def _pick_tile(n, preferred, granule):
    """Largest multiple of `granule` that divides n and is <= preferred.
    `n` is guaranteed to be a multiple of `granule` (n is a multiple of 128)."""
    preferred = max(granule, min(preferred, n))
    t = (preferred // granule) * granule
    while t > granule:
        if n % t == 0:
            return t
        t -= granule
    return granule


def triplet_loss(global_feat, labels, margin=None, normalize_feature=False,
                 tm=1024, tn=256, use_bf16_matmul=False):
    """Returns (loss, dist_ap, dist_an) matching TripletLoss.forward."""
    n, d = global_feat.shape

    x = global_feat
    if normalize_feature:
        # same formula as the reference normalize(): x / (||x||_2 + 1e-12)
        xf = x.astype(jnp.float32)
        nrm = jnp.sqrt(jnp.sum(xf * xf, axis=-1, keepdims=True))
        x = (xf / (nrm + 1e-12)).astype(global_feat.dtype)

    if use_bf16_matmul and x.dtype == jnp.float32:
        # Accuracy trade-off: ~3x MXU throughput on v5e and half the streamed
        # key-tile HBM bytes; distances still accumulated in f32.
        x = x.astype(jnp.bfloat16)

    bytes_x = jnp.dtype(x.dtype).itemsize

    # Anchor squared norms: tiny (1, N) f32 row, consumed only at finalize.
    xf32 = x.astype(jnp.float32)
    sqa = jnp.sum(xf32 * xf32, axis=-1)                         # (N,)
    lab = labels.astype(jnp.int32)

    # Pad N up to a multiple of 128 so both the lane (anchor) and sublane
    # (key) tilings are legal and never degenerate to one giant tile.
    n_pad = _round_up(n, 128)
    pad = n_pad - n
    if pad:
        x = jnp.pad(x, ((0, pad), (0, 0)))
        sqa = jnp.pad(sqa, (0, pad))
        lab = jnp.pad(lab, (0, pad), constant_values=-1)
    key_valid = (jnp.arange(n_pad, dtype=jnp.int32) < n).astype(jnp.int32)

    # ------------------------- tile selection -------------------------
    budget = 36 * 1024 * 1024           # v7x-safe working-set budget (64 MiB VMEM)
    sub_g = _sublane_granule(x.dtype)

    # keys live on the sublane axis
    tn_cap = max(sub_g, (budget // 3) // max(1, 2 * d * bytes_x))
    tn = _pick_tile(n_pad, min(tn, tn_cap), sub_g)

    # anchors live on the lane axis: VMEM cap + keep >= 2 "parallel" tiles so
    # v7x's two TensorCores both get work.
    per_tm = 2 * d * bytes_x + 6 * tn * 4 + 64      # anchors dbl-buf + f32 temps
    fixed = 2 * tn * d * bytes_x + 4 * tn * 8
    tm_cap = max(128, (budget - fixed) // per_tm)
    tm_pref = min(tm, tm_cap)
    if n_pad >= 256:
        tm_pref = min(tm_pref, n_pad // 2)
    tm = _pick_tile(n_pad, tm_pref, 128)

    grid = (n_pad // tm, n_pad // tn)

    # Derive vmem_limit_bytes from the actual footprint (v5e/v6e/v7x safe).
    est = (2 * tn * d * bytes_x + 2 * tm * d * bytes_x
           + 2 * (2 * tn + 2 * tm) * 4 + 8 * tm * 4
           + 6 * tn * tm * 4)
    vmem_limit = int(min(max(est * 13 // 10, 32 * 1024 * 1024),
                         60 * 1024 * 1024))

    cost = pl.CostEstimate(
        flops=2 * n_pad * n_pad * d,
        transcendentals=4 * n_pad,
        bytes_accessed=n_pad * d * bytes_x * (grid[0] + 1) + 10 * n_pad * 4)

    kernel = functools.partial(_triplet_tile_kernel, margin=margin)

    ap, an, per = pl.pallas_call(
        kernel,
        out_shape=(
            jax.ShapeDtypeStruct((1, n_pad), jnp.float32),  # dist_ap (lane-dense)
            jax.ShapeDtypeStruct((1, n_pad), jnp.float32),  # dist_an
            jax.ShapeDtypeStruct((1, n_pad), jnp.float32),  # per-anchor loss
        ),
        grid_spec=pltpu.PrefetchScalarGridSpec(
            num_scalar_prefetch=0,
            grid=grid,
            in_specs=[
                pl.BlockSpec((tn, d), lambda i, j: (j, 0)),   # key tile (TN, D)
                pl.BlockSpec((tm, d), lambda i, j: (i, 0)),   # anchor tile (TM, D)
                pl.BlockSpec((1, tm), lambda i, j: (0, i)),   # ||anchor||^2
                pl.BlockSpec((tn, 1), lambda i, j: (j, 0)),   # key labels
                pl.BlockSpec((1, tm), lambda i, j: (0, i)),   # anchor labels
                pl.BlockSpec((tn, 1), lambda i, j: (j, 0)),   # key validity mask
            ],
            out_specs=(
                pl.BlockSpec((1, tm), lambda i, j: (0, i)),
                pl.BlockSpec((1, tm), lambda i, j: (0, i)),
                pl.BlockSpec((1, tm), lambda i, j: (0, i)),
            ),
            scratch_shapes=[
                pltpu.VMEM((1, tm), jnp.float32),   # running max of 0.5||k||^2-<k,a> over positives
                pltpu.VMEM((1, tm), jnp.float32),   # running min over negatives
            ],
        ),
        compiler_params=pltpu.CompilerParams(
            dimension_semantics=("parallel", "arbitrary"),
            vmem_limit_bytes=vmem_limit,
        ),
        cost_estimate=cost,
    )(x, x, sqa.reshape(1, n_pad), lab.reshape(n_pad, 1),
      lab.reshape(1, n_pad), key_valid.reshape(n_pad, 1))

    # O(N) epilogue in the wrapper; padded anchors sliced away.
    dist_ap = ap[0, :n]
    dist_an = an[0, :n]
    loss = jnp.sum(per[0, :n]) / jnp.float32(n)
    return loss, dist_ap, dist_an


# ----------------------------- pure-JAX reference ---------------------------
def _reference(global_feat, labels, margin=None, normalize_feature=False):
    x = global_feat.astype(jnp.float32)
    if normalize_feature:
        x = x / (jnp.linalg.norm(x, axis=-1, keepdims=True) + 1e-12)
    sq = jnp.sum(x * x, axis=1, keepdims=True)
    dist = jnp.sqrt(jnp.maximum(sq + sq.T - 2.0 * (x @ x.T), 1e-12))
    is_pos = labels[:, None] == labels[None, :]
    dist_ap = jnp.max(jnp.where(is_pos, dist, -jnp.inf), axis=1)
    dist_an = jnp.min(jnp.where(is_pos, jnp.inf, dist), axis=1)
    if margin is not None:
        loss = jnp.mean(jnp.maximum(dist_ap - dist_an + margin, 0.0))
    else:
        z = dist_ap - dist_an
        loss = jnp.mean(jnp.maximum(z, 0.0) + jnp.log1p(jnp.exp(-jnp.abs(z))))
    return loss, dist_ap, dist_an


if __name__ == "__main__":
    key = jax.random.PRNGKey(0)

    # small case: 8 samples (4 ids x 2), 32-dim feats; exercises the padded-key
    # masking path (N=8 is padded to 128).
    N, D = 8, 32
    global_feat = jax.random.normal(key, (N, D), dtype=jnp.float32)
    labels = jnp.array([0, 0, 1, 1, 2, 2, 3, 3], dtype=jnp.int32)

    # margin=None -> SoftMarginLoss path (module default)
    loss, dist_ap, dist_an = triplet_loss(global_feat, labels, margin=None)
    jax.block_until_ready((loss, dist_ap, dist_an))
    ref_loss, ref_ap, ref_an = _reference(global_feat, labels, margin=None)
    assert jnp.allclose(loss, ref_loss, atol=1e-3), (loss, ref_loss)
    assert jnp.allclose(dist_ap, ref_ap, atol=1e-3)
    assert jnp.allclose(dist_an, ref_an, atol=1e-3)

    # margin=0.3 -> MarginRankingLoss path
    loss_m, ap_m, an_m = triplet_loss(global_feat, labels, margin=0.3)
    ref_loss_m, ref_ap_m, ref_an_m = _reference(global_feat, labels, margin=0.3)
    assert jnp.allclose(loss_m, ref_loss_m, atol=1e-3), (loss_m, ref_loss_m)
    assert jnp.allclose(ap_m, ref_ap_m, atol=1e-3)
    assert jnp.allclose(an_m, ref_an_m, atol=1e-3)

    # normalize_feature=True path
    loss_n, _, _ = triplet_loss(global_feat, labels, margin=0.3,
                                normalize_feature=True)
    ref_loss_n, _, _ = _reference(global_feat, labels, margin=0.3,
                                  normalize_feature=True)
    assert jnp.allclose(loss_n, ref_loss_n, atol=1e-3), (loss_n, ref_loss_n)

    # larger, awkward N=384 to exercise multi-tile grid + cross-tile
    # accumulation (grid has >1 step on both axes, no padding needed for 384).
    key2 = jax.random.PRNGKey(1)
    N2, D2 = 384, 64
    feat2 = jax.random.normal(key2, (N2, D2), dtype=jnp.float32)
    labels2 = jnp.repeat(jnp.arange(48, dtype=jnp.int32), 8)
    loss2, ap2, an2 = triplet_loss(feat2, labels2, margin=0.3)
    jax.block_until_ready((loss2, ap2, an2))
    ref_loss2, ref_ap2, ref_an2 = _reference(feat2, labels2, margin=0.3)
    assert jnp.allclose(loss2, ref_loss2, rtol=1e-3, atol=2e-3), (loss2, ref_loss2)
    assert jnp.allclose(ap2, ref_ap2, rtol=1e-3, atol=2e-3)
    assert jnp.allclose(an2, ref_an2, rtol=1e-3, atol=2e-3)

    print("KERNEL_OK")
</pallas_src>

<mosaic_0001>
module attributes {stable_mosaic.version = 11 : i64} {
  func.func @_triplet_tile_kernel(%arg0: i32, %arg1: i32, %arg2: memref<128x32xf32, #tpu.memory_space<vmem>>, %arg3: memref<128x32xf32, #tpu.memory_space<vmem>>, %arg4: memref<1x128xf32, #tpu.memory_space<vmem>>, %arg5: memref<128x1xi32, #tpu.memory_space<vmem>>, %arg6: memref<1x128xi32, #tpu.memory_space<vmem>>, %arg7: memref<128x1xi32, #tpu.memory_space<vmem>>, %arg8: memref<1x128xf32, #tpu.memory_space<vmem>>, %arg9: memref<1x128xf32, #tpu.memory_space<vmem>>, %arg10: memref<1x128xf32, #tpu.memory_space<vmem>>, %arg11: memref<1x128xf32, #tpu.memory_space<vmem>>, %arg12: memref<1x128xf32, #tpu.memory_space<vmem>>) attributes {dimension_semantics = [#tpu.dimension_semantics<parallel>, #tpu.dimension_semantics<arbitrary>], iteration_bounds = array<i64: 1, 1>, scalar_prefetch = 0 : i64, scratch_operands = 2 : i64, tpu.core_type = #tpu.core_type<tc>, window_params = [{transform_indices = @transform_0, window_bounds = array<i64: 128, 32>}, {transform_indices = @transform_1, window_bounds = array<i64: 128, 32>}, {transform_indices = @transform_2, window_bounds = array<i64: 1, 128>}, {transform_indices = @transform_3, window_bounds = array<i64: 128, 1>}, {transform_indices = @transform_4, window_bounds = array<i64: 1, 128>}, {transform_indices = @transform_5, window_bounds = array<i64: 128, 1>}, {transform_indices = @transform_6, window_bounds = array<i64: 1, 128>}, {transform_indices = @transform_7, window_bounds = array<i64: 1, 128>}, {transform_indices = @transform_8, window_bounds = array<i64: 1, 128>}]} {
    %c0_i32 = arith.constant 0 : i32
    %0 = arith.cmpi eq, %arg1, %c0_i32 : i32
    %1 = arith.extui %0 : i1 to i32
    %c0_i32_0 = arith.constant 0 : i32
    %2 = arith.cmpi ne, %1, %c0_i32_0 : i32
    scf.if %2 {
      %cst_28 = arith.constant 0xFF800000 : f32
      %43 = vector.broadcast %cst_28 : f32 to vector<1x128xf32>
      %c0_29 = arith.constant 0 : index
      %c0_30 = arith.constant 0 : index
      %44 = vector.load %arg11[%c0_29, %c0_30] : memref<1x128xf32, #tpu.memory_space<vmem>>, vector<1x128xf32>
      tpu.vector_store %arg11[%c0_29, %c0_30], %43 {strides = array<i32>} : memref<1x128xf32, #tpu.memory_space<vmem>>, vector<1x128xf32>,
      %cst_31 = arith.constant 0x7F800000 : f32
      %45 = vector.broadcast %cst_31 : f32 to vector<1x128xf32>
      %c0_32 = arith.constant 0 : index
      %c0_33 = arith.constant 0 : index
      %46 = vector.load %arg12[%c0_32, %c0_33] : memref<1x128xf32, #tpu.memory_space<vmem>>, vector<1x128xf32>
      tpu.vector_store %arg12[%c0_32, %c0_33], %45 {strides = array<i32>} : memref<1x128xf32, #tpu.memory_space<vmem>>, vector<1x128xf32>,
    } else {
    }
    %c0 = arith.constant 0 : index
    %c0_1 = arith.constant 0 : index
    %3 = vector.load %arg2[%c0, %c0_1] : memref<128x32xf32, #tpu.memory_space<vmem>>, vector<128x32xf32>
    %c0_2 = arith.constant 0 : index
    %c0_3 = arith.constant 0 : index
    %4 = vector.load %arg3[%c0_2, %c0_3] : memref<128x32xf32, #tpu.memory_space<vmem>>, vector<128x32xf32>
    %cst = arith.constant dense<0.000000e+00> : vector<128x128xf32>
    %5 = tpu.matmul %3, %4, %cst {dimension_numbers = #tpu.dot_dimension_numbers<[1], [1], [0], [0], [0, 0, 1, 0], [], []>} : vector<128x32xf32>, vector<128x32xf32>, vector<128x128xf32> -> vector<128x128xf32>
    %6 = arith.mulf %3, %3 : vector<128x32xf32>
    %cst_4 = arith.constant dense<0.000000e+00> : vector<128xf32>
    %7 = vector.multi_reduction <add>, %6, %cst_4 [1] : vector<128x32xf32> to vector<128xf32>
    %8 = vector.shape_cast %7 : vector<128xf32> to vector<128x1xf32>
    %cst_5 = arith.constant 5.000000e-01 : f32
    %9 = vector.broadcast %cst_5 : f32 to vector<128x1xf32>
    %10 = arith.mulf %9, %8 : vector<128x1xf32>
    %11 = vector.broadcast %10 : vector<128x1xf32> to vector<128x128xf32>
    %12 = arith.subf %11, %5 : vector<128x128xf32>
    %c0_6 = arith.constant 0 : index
    %c0_7 = arith.constant 0 : index
    %13 = vector.load %arg5[%c0_6, %c0_7] : memref<128x1xi32, #tpu.memory_space<vmem>>, vector<128x1xi32>
    %c0_8 = arith.constant 0 : index
    %c0_9 = arith.constant 0 : index
    %14 = vector.load %arg6[%c0_8, %c0_9] : memref<1x128xi32, #tpu.memory_space<vmem>>, vector<1x128xi32>
    %15 = vector.broadcast %13 : vector<128x1xi32> to vector<128x128xi32>
    %16 = vector.broadcast %14 : vector<1x128xi32> to vector<128x128xi32>
    %17 = arith.cmpi eq, %15, %16 : vector<128x128xi32>
    %c0_10 = arith.constant 0 : index
    %c0_11 = arith.constant 0 : index
    %18 = vector.load %arg7[%c0_10, %c0_11] : memref<128x1xi32, #tpu.memory_space<vmem>>, vector<128x1xi32>
    %c0_i32_12 = arith.constant 0 : i32
    %19 = vector.broadcast %c0_i32_12 : i32 to vector<128x1xi32>
    %20 = arith.cmpi ne, %18, %19 : vector<128x1xi32>
    %21 = vector.broadcast %20 : vector<128x1xi1> to vector<128x128xi1>
    %22 = arith.andi %17, %21 : vector<128x128xi1>
    %cst_13 = arith.constant 0xFF800000 : f32
    %23 = vector.broadcast %cst_13 : f32 to vector<128x128xf32>
    %24 = arith.select %22, %12, %23 : vector<128x128xi1>, vector<128x128xf32>
    %cst_14 = arith.constant dense<true> : vector<128x1xi1>
    %25 = arith.xori %20, %cst_14 : vector<128x1xi1>
    %26 = vector.broadcast %25 : vector<128x1xi1> to vector<128x128xi1>
    %27 = arith.ori %17, %26 : vector<128x128xi1>
    %cst_15 = arith.constant 0x7F800000 : f32
    %28 = vector.broadcast %cst_15 : f32 to vector<128x128xf32>
    %29 = arith.select %27, %28, %12 : vector<128x128xi1>, vector<128x128xf32>
    %c0_16 = arith.constant 0 : index
    %c0_17 = arith.constant 0 : index
    %30 = vector.load %arg11[%c0_16, %c0_17] : memref<1x128xf32, #tpu.memory_space<vmem>>, vector<1x128xf32>
    %cst_18 = arith.constant dense<0xFF800000> : vector<128xf32>
    %31 = vector.multi_reduction <maximumf>, %24, %cst_18 [0] : vector<128x128xf32> to vector<128xf32>
    %32 = vector.shape_cast %31 : vector<128xf32> to vector<1x128xf32>
    %33 = arith.maximumf %30, %32 : vector<1x128xf32>
    %c0_19 = arith.constant 0 : index
    %c0_20 = arith.constant 0 : index
    %34 = vector.load %arg11[%c0_19, %c0_20] : memref<1x128xf32, #tpu.memory_space<vmem>>, vector<1x128xf32>
    tpu.vector_store %arg11[%c0_19, %c0_20], %33 {strides = array<i32>} : memref<1x128xf32, #tpu.memory_space<vmem>>, vector<1x128xf32>,
    %c0_21 = arith.constant 0 : index
    %c0_22 = arith.constant 0 : index
    %35 = vector.load %arg12[%c0_21, %c0_22] : memref<1x128xf32, #tpu.memory_space<vmem>>, vector<1x128xf32>
    %cst_23 = arith.constant dense<0x7F800000> : vector<128xf32>
    %36 = vector.multi_reduction <minimumf>, %29, %cst_23 [0] : vector<128x128xf32> to vector<128xf32>
    %37 = vector.shape_cast %36 : vector<128xf32> to vector<1x128xf32>
    %38 = arith.minimumf %35, %37 : vector<1x128xf32>
    %c0_24 = arith.constant 0 : index
    %c0_25 = arith.constant 0 : index
    %39 = vector.load %arg12[%c0_24, %c0_25] : memref<1x128xf32, #tpu.memory_space<vmem>>, vector<1x128xf32>
    tpu.vector_store %arg12[%c0_24, %c0_25], %38 {strides = array<i32>} : memref<1x128xf32, #tpu.memory_space<vmem>>, vector<1x128xf32>,
    %c0_i32_26 = arith.constant 0 : i32
    %40 = arith.cmpi eq, %arg1, %c0_i32_26 : i32
    %41 = arith.extui %40 : i1 to i32
    %c0_i32_27 = arith.constant 0 : i32
    %42 = arith.cmpi ne, %41, %c0_i32_27 : i32
    scf.if %42 {
      %c0_28 = arith.constant 0 : index
      %c0_29 = arith.constant 0 : index
      %43 = vector.load %arg4[%c0_28, %c0_29] : memref<1x128xf32, #tpu.memory_space<vmem>>, vector<1x128xf32>
      %c0_30 = arith.constant 0 : index
      %c0_31 = arith.constant 0 : index
      %44 = vector.load %arg11[%c0_30, %c0_31] : memref<1x128xf32, #tpu.memory_space<vmem>>, vector<1x128xf32>
      %cst_32 = arith.constant 2.000000e+00 : f32
      %45 = vector.broadcast %cst_32 : f32 to vector<1x128xf32>
      %46 = arith.mulf %45, %44 : vector<1x128xf32>
      %47 = arith.addf %46, %43 : vector<1x128xf32>
      %cst_33 = arith.constant 9.99999996E-13 : f32
      %48 = vector.broadcast %cst_33 : f32 to vector<1x128xf32>
      %49 = arith.maximumf %47, %48 : vector<1x128xf32>
      %50 = math.sqrt %49 : vector<1x128xf32>
      %c0_34 = arith.constant 0 : index
      %c0_35 = arith.constant 0 : index
      %51 = vector.load %arg12[%c0_34, %c0_35] : memref<1x128xf32, #tpu.memory_space<vmem>>, vector<1x128xf32>
      %cst_36 = arith.constant 2.000000e+00 : f32
      %52 = vector.broadcast %cst_36 : f32 to vector<1x128xf32>
      %53 = arith.mulf %52, %51 : vector<1x128xf32>
      %54 = arith.addf %53, %43 : vector<1x128xf32>
      %cst_37 = arith.constant 9.99999996E-13 : f32
      %55 = vector.broadcast %cst_37 : f32 to vector<1x128xf32>
      %56 = arith.maximumf %54, %55 : vector<1x128xf32>
      %57 = math.sqrt %56 : vector<1x128xf32>
      %c0_38 = arith.constant 0 : index
      %c0_39 = arith.constant 0 : index
      %58 = vector.load %arg8[%c0_38, %c0_39] : memref<1x128xf32, #tpu.memory_space<vmem>>, vector<1x128xf32>
      tpu.vector_store %arg8[%c0_38, %c0_39], %50 {strides = array<i32>} : memref<1x128xf32, #tpu.memory_space<vmem>>, vector<1x128xf32>,
      %c0_40 = arith.constant 0 : index
      %c0_41 = arith.constant 0 : index
      %59 = vector.load %arg9[%c0_40, %c0_41] : memref<1x128xf32, #tpu.memory_space<vmem>>, vector<1x128xf32>
      tpu.vector_store %arg9[%c0_40, %c0_41], %57 {strides = array<i32>} : memref<1x128xf32, #tpu.memory_space<vmem>>, vector<1x128xf32>,
      %60 = arith.subf %50, %57 : vector<1x128xf32>
      %cst_42 = arith.constant 0.000000e+00 : f32
      %61 = vector.broadcast %cst_42 : f32 to vector<1x128xf32>
      %62 = arith.maximumf %60, %61 : vector<1x128xf32>
      %63 = math.absf %60 : vector<1x128xf32>
      %cst_43 = arith.constant 0.000000e+00 : f32
      %64 = vector.broadcast %cst_43 : f32 to vector<1x128xf32>
      %65 = arith.subf %64, %63 : vector<1x128xf32>
      %66 = math.exp %65 : vector<1x128xf32>
      %67 = math.log1p %66 : vector<1x128xf32>
      %68 = arith.addf %62, %67 : vector<1x128xf32>
      %c0_44 = arith.constant 0 : index
      %c0_45 = arith.constant 0 : index
      %69 = vector.load %arg10[%c0_44, %c0_45] : memref<1x128xf32, #tpu.memory_space<vmem>>, vector<1x128xf32>
      tpu.vector_store %arg10[%c0_44, %c0_45], %68 {strides = array<i32>} : memref<1x128xf32, #tpu.memory_space<vmem>>, vector<1x128xf32>,
    } else {
    }
    return
  }
  func.func @transform_0(%arg0: i32, %arg1: i32) -> (i32, i32) {
    %c0_i32 = arith.constant 0 : i32
    %c0_i32_0 = arith.constant 0 : i32
    return %arg1, %c0_i32 : i32, i32
  }
  func.func @transform_1(%arg0: i32, %arg1: i32) -> (i32, i32) {
    %c0_i32 = arith.constant 0 : i32
    %c0_i32_0 = arith.constant 0 : i32
    return %arg0, %c0_i32 : i32, i32
  }
  func.func @transform_2(%arg0: i32, %arg1: i32) -> (i32, i32) {
    %c0_i32 = arith.constant 0 : i32
    %c0_i32_0 = arith.constant 0 : i32
    return %c0_i32, %arg0 : i32, i32
  }
  func.func @transform_3(%arg0: i32, %arg1: i32) -> (i32, i32) {
    %c0_i32 = arith.constant 0 : i32
    %c0_i32_0 = arith.constant 0 : i32
    return %arg1, %c0_i32 : i32, i32
  }
  func.func @transform_4(%arg0: i32, %arg1: i32) -> (i32, i32) {
    %c0_i32 = arith.constant 0 : i32
    %c0_i32_0 = arith.constant 0 : i32
    return %c0_i32, %arg0 : i32, i32
  }
  func.func @transform_5(%arg0: i32, %arg1: i32) -> (i32, i32) {
    %c0_i32 = arith.constant 0 : i32
    %c0_i32_0 = arith.constant 0 : i32
    return %arg1, %c0_i32 : i32, i32
  }
  func.func @transform_6(%arg0: i32, %arg1: i32) -> (i32, i32) {
    %c0_i32 = arith.constant 0 : i32
    %c0_i32_0 = arith.constant 0 : i32
    return %c0_i32, %arg0 : i32, i32
  }
  func.func @transform_7(%arg0: i32, %arg1: i32) -> (i32, i32) {
    %c0_i32 = arith.constant 0 : i32
    %c0_i32_0 = arith.constant 0 : i32
    return %c0_i32, %arg0 : i32, i32
  }
  func.func @transform_8(%arg0: i32, %arg1: i32) -> (i32, i32) {
    %c0_i32 = arith.constant 0 : i32
    %c0_i32_0 = arith.constant 0 : i32
    return %c0_i32, %arg0 : i32, i32
  }
}

</mosaic_0001>

<llo_original>
// kernel: tpu_custom_call.1
$region0: #{tpu_custom_call.1}
  #allocation0 [shape = 'u32[]', space=smem, size = 0x4, offset = 0x4, fixed_abs, tag = 'smem constant byte address 0x4 - core index']
  #allocation1 [shape = 'u32[72,128]{1,0:T(1,128)}', space=vmem, size = 0x9000, scoped, tag = 'internal scratch']
  #allocation2 [shape = 'f32[1,128]{1,0:T(1,128)}', space=vmem, size = 0x200, scoped, tag = 'scratch operand']
  #allocation3 [shape = 'f32[1,128]{1,0:T(1,128)}', space=vmem, size = 0x200, scoped, tag = 'scratch operand']
  %s0 = inlined_call_operand.vmem [shape: f32[128,32], index: 0, kind: input, shape index: {}]
  %s1 = inlined_call_operand.vmem [shape: f32[128,32], index: 1, kind: input, shape index: {}]
  %s2 = inlined_call_operand.vmem [shape: f32[1,128], index: 2, kind: input, shape index: {}]
  %s3 = inlined_call_operand.vmem [shape: s32[128,1], index: 3, kind: input, shape index: {}]
  %s4 = inlined_call_operand.vmem [shape: s32[1,128], index: 4, kind: input, shape index: {}]
  %s5 = inlined_call_operand.vmem [shape: s32[128,1], index: 5, kind: input, shape index: {}]
  %s6 = inlined_call_operand.hbm [shape: f32[1,128], index: 6, kind: output, shape index: {0}]
  %s7 = inlined_call_operand.hbm [shape: f32[1,128], index: 7, kind: output, shape index: {1}]
  %s8 = inlined_call_operand.hbm [shape: f32[1,128], index: 8, kind: output, shape index: {2}]
  %9 = xla_tuple %s6, %s7, %s8
  %s10 = sld [smem:[#allocation0]]
  $region58: #{tpu_custom_call.1} parent=0
    _
  %s12 = ssub.s32 1, %s10
  %s13 = scalar_select 0, %s12, %s10
  $region1: #{tpu_custom_call.1} parent=0
    #allocation4 [shape = 'u8[512]{0}', space=vmem, size = 0x400, scoped, tag = 'output window, operand 0, single buffered']
    #allocation5 [shape = 's32[1]{0}', space=sflag, size = 0x4, scoped, tag = 'scoped memory for tpu_custom_call.1']
    #allocation6 [shape = 'u8[512]{0}', space=vmem, size = 0x400, scoped, tag = 'output window, operand 1, single buffered']
    #allocation7 [shape = 's32[1]{0}', space=sflag, size = 0x4, scoped, tag = 'scoped memory for tpu_custom_call.1']
    #allocation8 [shape = 'u8[512]{0}', space=vmem, size = 0x400, scoped, tag = 'output window, operand 2, single buffered']
    %14 = vsyncpa [#allocation5], 0
    %15 = vsyncpa [#allocation7], 0
    // Predicated region
    $region2: #{tpu_custom_call.1} parent=1 // pred_check
      _
    $region3: #{tpu_custom_call.1} parent=1 // pred_check_branch
      %17 = sbr.rel (0) target = $region5
    $region4: #{tpu_custom_call.1} parent=1 // pred_region
      _
    $region5: #{tpu_custom_call.1} parent=1 // pred_fallthru
      _
    // Predicated region
    $region6: #{tpu_custom_call.1} parent=1 // pred_check
      _
    $region7: #{tpu_custom_call.1} parent=1 // pred_check_branch
      %19 = sbr.rel (0) target = $region9
    $region8: #{tpu_custom_call.1} parent=1 // pred_region
      _
    $region9: #{tpu_custom_call.1} parent=1 // pred_fallthru
      _
    // Predicated region
    $region10: #{tpu_custom_call.1} parent=1 // pred_check
      _
    $region11: #{tpu_custom_call.1} parent=1 // pred_check_branch
      %21 = sbr.rel (0) target = $region13
    $region12: #{tpu_custom_call.1} parent=1 // pred_region
      _
    $region13: #{tpu_custom_call.1} parent=1 // pred_fallthru
      _
    // Predicated region
    $region14: #{tpu_custom_call.1} parent=1 // pred_check
      _
    $region15: #{tpu_custom_call.1} parent=1 // pred_check_branch
      %23 = sbr.rel (0) target = $region17
    $region16: #{tpu_custom_call.1} parent=1 // pred_region
      _
    $region17: #{tpu_custom_call.1} parent=1 // pred_fallthru
      _
    // Predicated region
    $region18: #{tpu_custom_call.1} parent=1 // pred_check
      _
    $region19: #{tpu_custom_call.1} parent=1 // pred_check_branch
      %25 = sbr.rel (0) target = $region21
    $region20: #{tpu_custom_call.1} parent=1 // pred_region
      _
    $region21: #{tpu_custom_call.1} parent=1 // pred_fallthru
      _
    // Predicated region
    $region22: #{tpu_custom_call.1} parent=1 // pred_check
      _
    $region23: #{tpu_custom_call.1} parent=1 // pred_check_branch
      %27 = sbr.rel (0) target = $region25
    $region24: #{tpu_custom_call.1} parent=1 // pred_region
      _
    $region25: #{tpu_custom_call.1} parent=1 // pred_fallthru
      _
    %p28 = scmp.eq.s32.totalorder 0, 0
    // Predicated region
    $region26: #{tpu_custom_call.1} parent=1 // pred_check
      %p29 = pneg %p28
    $region27: #{tpu_custom_call.1} parent=1 // pred_check_branch
      %31 = sbr.rel (%p29) target = $region29
    $region28: #{tpu_custom_call.1} parent=1 // pred_region
      %32 = vst [vmem:[#allocation2] sm:$0x1] -inf
      %33 = vst [vmem:[#allocation3] sm:$0x1] inf
    $region29: #{tpu_custom_call.1} parent=1 // pred_fallthru
      _
    %v34 = vld [vmem:[%s0] sm:$0xff]
    %v35 = vld [vmem:[%s0 + $0x8] sm:$0xff]
    %v36 = vld [vmem:[%s0 + $0x10] sm:$0xff]
    %v37 = vld [vmem:[%s0 + $0x18] sm:$0xff]
    %v38 = vld [vmem:[%s0 + $0x20] sm:$0xff]
    %v39 = vld [vmem:[%s0 + $0x28] sm:$0xff]
    %v40 = vld [vmem:[%s0 + $0x30] sm:$0xff]
    %v41 = vld [vmem:[%s0 + $0x38] sm:$0xff]
    %v42 = vld [vmem:[%s0 + $0x40] sm:$0xff]
    %v43 = vld [vmem:[%s0 + $0x48] sm:$0xff]
    %v44 = vld [vmem:[%s0 + $0x50] sm:$0xff]
    %v45 = vld [vmem:[%s0 + $0x58] sm:$0xff]
    %v46 = vld [vmem:[%s0 + $0x60] sm:$0xff]
    %v47 = vld [vmem:[%s0 + $0x68] sm:$0xff]
    %v48 = vld [vmem:[%s0 + $0x70] sm:$0xff]
    %v49 = vld [vmem:[%s0 + $0x78] sm:$0xff]
    %v50 = vld [vmem:[%s1] sm:$0xff]
    %v51 = vld [vmem:[%s1 + $0x8] sm:$0xff]
    %v52 = vld [vmem:[%s1 + $0x10] sm:$0xff]
    %v53 = vld [vmem:[%s1 + $0x18] sm:$0xff]
    %v54 = vld [vmem:[%s1 + $0x20] sm:$0xff]
    %v55 = vld [vmem:[%s1 + $0x28] sm:$0xff]
    %v56 = vld [vmem:[%s1 + $0x30] sm:$0xff]
    %v57 = vld [vmem:[%s1 + $0x38] sm:$0xff]
    %v58 = vld [vmem:[%s1 + $0x40] sm:$0xff]
    %v59 = vld [vmem:[%s1 + $0x48] sm:$0xff]
    %v60 = vld [vmem:[%s1 + $0x50] sm:$0xff]
    %v61 = vld [vmem:[%s1 + $0x58] sm:$0xff]
    %v62 = vld [vmem:[%s1 + $0x60] sm:$0xff]
    %v63 = vld [vmem:[%s1 + $0x68] sm:$0xff]
    %v64 = vld [vmem:[%s1 + $0x70] sm:$0xff]
    %v65 = vld [vmem:[%s1 + $0x78] sm:$0xff]
    %vm66 = vcmask 261120
    %v68 = vsel %vm66, %v34, 0
    %v71 = vsel %vm66, %v35, 0
    %v74 = vsel %vm66, %v36, 0
    %v77 = vsel %vm66, %v37, 0
    %v80 = vsel %vm66, %v38, 0
    %v83 = vsel %vm66, %v39, 0
    %v86 = vsel %vm66, %v40, 0
    %v89 = vsel %vm66, %v41, 0
    %v92 = vsel %vm66, %v42, 0
    %v95 = vsel %vm66, %v43, 0
    %v98 = vsel %vm66, %v44, 0
    %v101 = vsel %vm66, %v45, 0
    %v104 = vsel %vm66, %v46, 0
    %v107 = vsel %vm66, %v47, 0
    %v110 = vsel %vm66, %v48, 0
    %v113 = vsel %vm66, %v49, 0
    %v116 = vsel %vm66, %v50, 0
    %v119 = vsel %vm66, %v51, 0
    %v122 = vsel %vm66, %v52, 0
    %v125 = vsel %vm66, %v53, 0
    %v128 = vsel %vm66, %v54, 0
    %v131 = vsel %vm66, %v55, 0
    %v134 = vsel %vm66, %v56, 0
    %v137 = vsel %vm66, %v57, 0
    %v140 = vsel %vm66, %v58, 0
    %v143 = vsel %vm66, %v59, 0
    %v146 = vsel %vm66, %v60, 0
    %v149 = vsel %vm66, %v61, 0
    %v152 = vsel %vm66, %v62, 0
    %v155 = vsel %vm66, %v63, 0
    %v158 = vsel %vm66, %v64, 0
    %v161 = vsel %vm66, %v65, 0
    %163 = vmatpush.xpose.msra.mxu0 %v161
    %164 = vmatpush.xpose.msra.mxu0 %v158
    %165 = vmatpush.xpose.msra.mxu0 %v155
    %166 = vmatpush.xpose.msra.mxu0 %v152
    %167 = vmatpush.xpose.msra.mxu0 %v149
    %168 = vmatpush.xpose.msra.mxu0 %v146
    %169 = vmatpush.xpose.msra.mxu0 %v143
    %170 = vmatpush.xpose.msra.mxu0 %v140
    %171 = vmatpush.xpose.msra.mxu0 %v137
    %172 = vmatpush.xpose.msra.mxu0 %v134
    %173 = vmatpush.xpose.msra.mxu0 %v131
    %174 = vmatpush.xpose.msra.mxu0 %v128
    %175 = vmatpush.xpose.msra.mxu0 %v125
    %176 = vmatpush.xpose.msra.mxu0 %v122
    %177 = vmatpush.xpose.msra.mxu0 %v119
    %178 = vmatpush.xpose.msra.mxu0 %v116
    %179 = vmatmul.f32.gmra.mxu0 %v68
    %v180 = vpop.f32.mrf.mxu0
    %v181 = vadd.f32 0.0, %v180
    %182 = vmatmul.f32.gmra.mxu0 %v71
    %v183 = vpop.f32.mrf.mxu0
    %v184 = vadd.f32 0.0, %v183
    %185 = vmatmul.f32.gmra.mxu0 %v74
    %v186 = vpop.f32.mrf.mxu0
    %v187 = vadd.f32 0.0, %v186
    %188 = vmatmul.f32.gmra.mxu0 %v77
    %v189 = vpop.f32.mrf.mxu0
    %v190 = vadd.f32 0.0, %v189
    %191 = vmatmul.f32.gmra.mxu0 %v80
    %v192 = vpop.f32.mrf.mxu0
    %v193 = vadd.f32 0.0, %v192
    %194 = vmatmul.f32.gmra.mxu0 %v83
    %v195 = vpop.f32.mrf.mxu0
    %v196 = vadd.f32 0.0, %v195
    %197 = vmatmul.f32.gmra.mxu0 %v86
    %v198 = vpop.f32.mrf.mxu0
    %v199 = vadd.f32 0.0, %v198
    %200 = vmatmul.f32.gmra.mxu0 %v89
    %v201 = vpop.f32.mrf.mxu0
    %v202 = vadd.f32 0.0, %v201
    %203 = vmatmul.f32.gmra.mxu0 %v92
    %v204 = vpop.f32.mrf.mxu0
    %v205 = vadd.f32 0.0, %v204
    %206 = vmatmul.f32.gmra.mxu0 %v95
    %v207 = vpop.f32.mrf.mxu0
    %v208 = vadd.f32 0.0, %v207
    %209 = vmatmul.f32.gmra.mxu0 %v98
    %v210 = vpop.f32.mrf.mxu0
    %v211 = vadd.f32 0.0, %v210
    %212 = vmatmul.f32.gmra.mxu0 %v101
    %v213 = vpop.f32.mrf.mxu0
    %v214 = vadd.f32 0.0, %v213
    %215 = vmatmul.f32.gmra.mxu0 %v104
    %v216 = vpop.f32.mrf.mxu0
    %v217 = vadd.f32 0.0, %v216
    %218 = vmatmul.f32.gmra.mxu0 %v107
    %v219 = vpop.f32.mrf.mxu0
    %v220 = vadd.f32 0.0, %v219
    %221 = vmatmul.f32.gmra.mxu0 %v110
    %v222 = vpop.f32.mrf.mxu0
    %v223 = vadd.f32 0.0, %v222
    %224 = vmatmul.f32.gmra.mxu0 %v113
    %v225 = vpop.f32.mrf.mxu0
    %v226 = vadd.f32 0.0, %v225
    %227 = vdwg.mxu0
    %v228 = vmul.f32 %v34, %v34
    %v229 = vmul.f32 %v35, %v35
    %v230 = vmul.f32 %v36, %v36
    %v231 = vmul.f32 %v37, %v37
    %v232 = vmul.f32 %v38, %v38
    %v233 = vmul.f32 %v39, %v39
    %v234 = vmul.f32 %v40, %v40
    %v235 = vmul.f32 %v41, %v41
    %v236 = vmul.f32 %v42, %v42
    %v237 = vmul.f32 %v43, %v43
    %v238 = vmul.f32 %v44, %v44
    %v239 = vmul.f32 %v45, %v45
    %v240 = vmul.f32 %v46, %v46
    %v241 = vmul.f32 %v47, %v47
    %v242 = vmul.f32 %v48, %v48
    %v243 = vmul.f32 %v49, %v49
    %v244 = vsel %vm66, %v228, 0.0
    %245 = vadd.xlane.f32.xlu0 %v244
    %v246 = vpop.xlane.xlu0 %245
    %v247 = vsel %vm66, %v229, 0.0
    %248 = vadd.xlane.f32.xlu0 %v247
    %v249 = vpop.xlane.xlu0 %248
    %v250 = vsel %vm66, %v230, 0.0
    %251 = vadd.xlane.f32.xlu0 %v250
    %v252 = vpop.xlane.xlu0 %251
    %v253 = vsel %vm66, %v231, 0.0
    %254 = vadd.xlane.f32.xlu0 %v253
    %v255 = vpop.xlane.xlu0 %254
    %v256 = vsel %vm66, %v232, 0.0
    %257 = vadd.xlane.f32.xlu0 %v256
    %v258 = vpop.xlane.xlu0 %257
    %v259 = vsel %vm66, %v233, 0.0
    %260 = vadd.xlane.f32.xlu0 %v259
    %v261 = vpop.xlane.xlu0 %260
    %v262 = vsel %vm66, %v234, 0.0
    %263 = vadd.xlane.f32.xlu0 %v262
    %v264 = vpop.xlane.xlu0 %263
    %v265 = vsel %vm66, %v235, 0.0
    %266 = vadd.xlane.f32.xlu0 %v265
    %v267 = vpop.xlane.xlu0 %266
    %v268 = vsel %vm66, %v236, 0.0
    %269 = vadd.xlane.f32.xlu0 %v268
    %v270 = vpop.xlane.xlu0 %269
    %v271 = vsel %vm66, %v237, 0.0
    %272 = vadd.xlane.f32.xlu0 %v271
    %v273 = vpop.xlane.xlu0 %272
    %v274 = vsel %vm66, %v238, 0.0
    %275 = vadd.xlane.f32.xlu0 %v274
    %v276 = vpop.xlane.xlu0 %275
    %v277 = vsel %vm66, %v239, 0.0
    %278 = vadd.xlane.f32.xlu0 %v277
    %v279 = vpop.xlane.xlu0 %278
    %v280 = vsel %vm66, %v240, 0.0
    %281 = vadd.xlane.f32.xlu0 %v280
    %v282 = vpop.xlane.xlu0 %281
    %v283 = vsel %vm66, %v241, 0.0
    %284 = vadd.xlane.f32.xlu0 %v283
    %v285 = vpop.xlane.xlu0 %284
    %v286 = vsel %vm66, %v242, 0.0
    %287 = vadd.xlane.f32.xlu0 %v286
    %v288 = vpop.xlane.xlu0 %287
    %v289 = vsel %vm66, %v243, 0.0
    %290 = vadd.xlane.f32.xlu0 %v289
    %v291 = vpop.xlane.xlu0 %290
    %v292 = vmul.f32 %v246, 0.5
    %v293 = vmul.f32 %v249, 0.5
    %v294 = vmul.f32 %v252, 0.5
    %v295 = vmul.f32 %v255, 0.5
    %v296 = vmul.f32 %v258, 0.5
    %v297 = vmul.f32 %v261, 0.5
    %v298 = vmul.f32 %v264, 0.5
    %v299 = vmul.f32 %v267, 0.5
    %v300 = vmul.f32 %v270, 0.5
    %v301 = vmul.f32 %v273, 0.5
    %v302 = vmul.f32 %v276, 0.5
    %v303 = vmul.f32 %v279, 0.5
    %v304 = vmul.f32 %v282, 0.5
    %v305 = vmul.f32 %v285, 0.5
    %v306 = vmul.f32 %v288, 0.5
    %v307 = vmul.f32 %v291, 0.5
    %v308 = vsub.f32 %v292, %v181
    %v309 = vsub.f32 %v293, %v184
    %v310 = vsub.f32 %v294, %v187
    %v311 = vsub.f32 %v295, %v190
    %v312 = vsub.f32 %v296, %v193
    %v313 = vsub.f32 %v297, %v196
    %v314 = vsub.f32 %v298, %v199
    %v315 = vsub.f32 %v299, %v202
    %v316 = vsub.f32 %v300, %v205
    %v317 = vsub.f32 %v301, %v208
    %v318 = vsub.f32 %v302, %v211
    %v319 = vsub.f32 %v303, %v214
    %v320 = vsub.f32 %v304, %v217
    %v321 = vsub.f32 %v305, %v220
    %v322 = vsub.f32 %v306, %v223
    %v323 = vsub.f32 %v307, %v226
    %v324 = vld [vmem:[%s3] sm:$0xff]
    %v325 = vld [vmem:[%s3 + $0x8] sm:$0xff]
    %v326 = vld [vmem:[%s3 + $0x10] sm:$0xff]
    %v327 = vld [vmem:[%s3 + $0x18] sm:$0xff]
    %v328 = vld [vmem:[%s3 + $0x20] sm:$0xff]
    %v329 = vld [vmem:[%s3 + $0x28] sm:$0xff]
    %v330 = vld [vmem:[%s3 + $0x30] sm:$0xff]
    %v331 = vld [vmem:[%s3 + $0x38] sm:$0xff]
    %v332 = vld [vmem:[%s3 + $0x40] sm:$0xff]
    %v333 = vld [vmem:[%s3 + $0x48] sm:$0xff]
    %v334 = vld [vmem:[%s3 + $0x50] sm:$0xff]
    %v335 = vld [vmem:[%s3 + $0x58] sm:$0xff]
    %v336 = vld [vmem:[%s3 + $0x60] sm:$0xff]
    %v337 = vld [vmem:[%s3 + $0x68] sm:$0xff]
    %v338 = vld [vmem:[%s3 + $0x70] sm:$0xff]
    %v339 = vld [vmem:[%s3 + $0x78] sm:$0xff]
    %v340 = vld [vmem:[%s4] sm:$0x1]
    %341 = vset.pattern.permute.xlu0 0
    %342 = vperm.xlu0 %341, %v324
    %v343 = vpop.permute.xlu0 %342
    %344 = vset.pattern.permute.xlu0 0
    %345 = vperm.xlu0 %344, %v325
    %v346 = vpop.permute.xlu0 %345
    %347 = vset.pattern.permute.xlu0 0
    %348 = vperm.xlu0 %347, %v326
    %v349 = vpop.permute.xlu0 %348
    %350 = vset.pattern.permute.xlu0 0
    %351 = vperm.xlu0 %350, %v327
    %v352 = vpop.permute.xlu0 %351
    %353 = vset.pattern.permute.xlu0 0
    %354 = vperm.xlu0 %353, %v328
    %v355 = vpop.permute.xlu0 %354
    %356 = vset.pattern.permute.xlu0 0
    %357 = vperm.xlu0 %356, %v329
    %v358 = vpop.permute.xlu0 %357
    %359 = vset.pattern.permute.xlu0 0
    %360 = vperm.xlu0 %359, %v330
    %v361 = vpop.permute.xlu0 %360
    %362 = vset.pattern.permute.xlu0 0
    %363 = vperm.xlu0 %362, %v331
    %v364 = vpop.permute.xlu0 %363
    %365 = vset.pattern.permute.xlu0 0
    %366 = vperm.xlu0 %365, %v332
    %v367 = vpop.permute.xlu0 %366
    %368 = vset.pattern.permute.xlu0 0
    %369 = vperm.xlu0 %368, %v333
    %v370 = vpop.permute.xlu0 %369
    %371 = vset.pattern.permute.xlu0 0
    %372 = vperm.xlu0 %371, %v334
    %v373 = vpop.permute.xlu0 %372
    %374 = vset.pattern.permute.xlu0 0
    %375 = vperm.xlu0 %374, %v335
    %v376 = vpop.permute.xlu0 %375
    %377 = vset.pattern.permute.xlu0 0
    %378 = vperm.xlu0 %377, %v336
    %v379 = vpop.permute.xlu0 %378
    %380 = vset.pattern.permute.xlu0 0
    %381 = vperm.xlu0 %380, %v337
    %v382 = vpop.permute.xlu0 %381
    %383 = vset.pattern.permute.xlu0 0
    %384 = vperm.xlu0 %383, %v338
    %v385 = vpop.permute.xlu0 %384
    %386 = vset.pattern.permute.xlu0 0
    %387 = vperm.xlu0 %386, %v339
    %v388 = vpop.permute.xlu0 %387
    %v389 = vperm.slane %v340, 0
    %vm390 = vcmp.eq.s32.totalorder %v343, %v389
    %vm391 = vcmp.eq.s32.totalorder %v346, %v389
    %vm392 = vcmp.eq.s32.totalorder %v349, %v389
    %vm393 = vcmp.eq.s32.totalorder %v352, %v389
    %vm394 = vcmp.eq.s32.totalorder %v355, %v389
    %vm395 = vcmp.eq.s32.totalorder %v358, %v389
    %vm396 = vcmp.eq.s32.totalorder %v361, %v389
    %vm397 = vcmp.eq.s32.totalorder %v364, %v389
    %vm398 = vcmp.eq.s32.totalorder %v367, %v389
    %vm399 = vcmp.eq.s32.totalorder %v370, %v389
    %vm400 = vcmp.eq.s32.totalorder %v373, %v389
    %vm401 = vcmp.eq.s32.totalorder %v376, %v389
    %vm402 = vcmp.eq.s32.totalorder %v379, %v389
    %vm403 = vcmp.eq.s32.totalorder %v382, %v389
    %vm404 = vcmp.eq.s32.totalorder %v385, %v389
    %vm405 = vcmp.eq.s32.totalorder %v388, %v389
    %v406 = vld [vmem:[%s5] sm:$0xff]
    %v407 = vld [vmem:[%s5 + $0x8] sm:$0xff]
    %v408 = vld [vmem:[%s5 + $0x10] sm:$0xff]
    %v409 = vld [vmem:[%s5 + $0x18] sm:$0xff]
    %v410 = vld [vmem:[%s5 + $0x20] sm:$0xff]
    %v411 = vld [vmem:[%s5 + $0x28] sm:$0xff]
    %v412 = vld [vmem:[%s5 + $0x30] sm:$0xff]
    %v413 = vld [vmem:[%s5 + $0x38] sm:$0xff]
    %v414 = vld [vmem:[%s5 + $0x40] sm:$0xff]
    %v415 = vld [vmem:[%s5 + $0x48] sm:$0xff]
    %v416 = vld [vmem:[%s5 + $0x50] sm:$0xff]
    %v417 = vld [vmem:[%s5 + $0x58] sm:$0xff]
    %v418 = vld [vmem:[%s5 + $0x60] sm:$0xff]
    %v419 = vld [vmem:[%s5 + $0x68] sm:$0xff]
    %v420 = vld [vmem:[%s5 + $0x70] sm:$0xff]
    %v421 = vld [vmem:[%s5 + $0x78] sm:$0xff]
    %vm422 = vcmp.ne.s32.totalorder %v406, 0
    %vm423 = vcmp.ne.s32.totalorder %v407, 0
    %vm424 = vcmp.ne.s32.totalorder %v408, 0
    %vm425 = vcmp.ne.s32.totalorder %v409, 0
    %vm426 = vcmp.ne.s32.totalorder %v410, 0
    %vm427 = vcmp.ne.s32.totalorder %v411, 0
    %vm428 = vcmp.ne.s32.totalorder %v412, 0
    %vm429 = vcmp.ne.s32.totalorder %v413, 0
    %vm430 = vcmp.ne.s32.totalorder %v414, 0
    %vm431 = vcmp.ne.s32.totalorder %v415, 0
    %vm432 = vcmp.ne.s32.totalorder %v416, 0
    %vm433 = vcmp.ne.s32.totalorder %v417, 0
    %vm434 = vcmp.ne.s32.totalorder %v418, 0
    %vm435 = vcmp.ne.s32.totalorder %v419, 0
    %vm436 = vcmp.ne.s32.totalorder %v420, 0
    %vm437 = vcmp.ne.s32.totalorder %v421, 0
    %v438 = vsel %vm422, 1, 0
    %v439 = vsel %vm423, 1, 0
    %v440 = vsel %vm424, 1, 0
    %v441 = vsel %vm425, 1, 0
    %v442 = vsel %vm426, 1, 0
    %v443 = vsel %vm427, 1, 0
    %v444 = vsel %vm428, 1, 0
    %v445 = vsel %vm429, 1, 0
    %v446 = vsel %vm430, 1, 0
    %v447 = vsel %vm431, 1, 0
    %v448 = vsel %vm432, 1, 0
    %v449 = vsel %vm433, 1, 0
    %v450 = vsel %vm434, 1, 0
    %v451 = vsel %vm435, 1, 0
    %v452 = vsel %vm436, 1, 0
    %v453 = vsel %vm437, 1, 0
    %454 = vset.pattern.permute.xlu0 0
    %455 = vperm.xlu0 %454, %v438
    %v456 = vpop.permute.xlu0 %455
    %457 = vset.pattern.permute.xlu0 0
    %458 = vperm.xlu0 %457, %v439
    %v459 = vpop.permute.xlu0 %458
    %460 = vset.pattern.permute.xlu0 0
    %461 = vperm.xlu0 %460, %v440
    %v462 = vpop.permute.xlu0 %461
    %463 = vset.pattern.permute.xlu0 0
    %464 = vperm.xlu0 %463, %v441
    %v465 = vpop.permute.xlu0 %464
    %466 = vset.pattern.permute.xlu0 0
    %467 = vperm.xlu0 %466, %v442
    %v468 = vpop.permute.xlu0 %467
    %469 = vset.pattern.permute.xlu0 0
    %470 = vperm.xlu0 %469, %v443
    %v471 = vpop.permute.xlu0 %470
    %472 = vset.pattern.permute.xlu0 0
    %473 = vperm.xlu0 %472, %v444
    %v474 = vpop.permute.xlu0 %473
    %475 = vset.pattern.permute.xlu0 0
    %476 = vperm.xlu0 %475, %v445
    %v477 = vpop.permute.xlu0 %476
    %478 = vset.pattern.permute.xlu0 0
    %479 = vperm.xlu0 %478, %v446
    %v480 = vpop.permute.xlu0 %479
    %481 = vset.pattern.permute.xlu0 0
    %482 = vperm.xlu0 %481, %v447
    %v483 = vpop.permute.xlu0 %482
    %484 = vset.pattern.permute.xlu0 0
    %485 = vperm.xlu0 %484, %v448
    %v486 = vpop.permute.xlu0 %485
    %487 = vset.pattern.permute.xlu0 0
    %488 = vperm.xlu0 %487, %v449
    %v489 = vpop.permute.xlu0 %488
    %490 = vset.pattern.permute.xlu0 0
    %491 = vperm.xlu0 %490, %v450
    %v492 = vpop.permute.xlu0 %491
    %493 = vset.pattern.permute.xlu0 0
    %494 = vperm.xlu0 %493, %v451
    %v495 = vpop.permute.xlu0 %494
    %496 = vset.pattern.permute.xlu0 0
    %497 = vperm.xlu0 %496, %v452
    %v498 = vpop.permute.xlu0 %497
    %499 = vset.pattern.permute.xlu0 0
    %500 = vperm.xlu0 %499, %v453
    %v501 = vpop.permute.xlu0 %500
    %vm502 = vcmp.eq.s32.totalorder %v456, 1
    %vm503 = vcmp.eq.s32.totalorder %v459, 1
    %vm504 = vcmp.eq.s32.totalorder %v462, 1
    %vm505 = vcmp.eq.s32.totalorder %v465, 1
    %vm506 = vcmp.eq.s32.totalorder %v468, 1
    %vm507 = vcmp.eq.s32.totalorder %v471, 1
    %vm508 = vcmp.eq.s32.totalorder %v474, 1
    %vm509 = vcmp.eq.s32.totalorder %v477, 1
    %vm510 = vcmp.eq.s32.totalorder %v480, 1
    %vm511 = vcmp.eq.s32.totalorder %v483, 1
    %vm512 = vcmp.eq.s32.totalorder %v486, 1
    %vm513 = vcmp.eq.s32.totalorder %v489, 1
    %vm514 = vcmp.eq.s32.totalorder %v492, 1
    %vm515 = vcmp.eq.s32.totalorder %v495, 1
    %vm516 = vcmp.eq.s32.totalorder %v498, 1
    %vm517 = vcmp.eq.s32.totalorder %v501, 1
    %vm518 = vmand %vm390, %vm502
    %vm519 = vmand %vm391, %vm503
    %vm520 = vmand %vm392, %vm504
    %vm521 = vmand %vm393, %vm505
    %vm522 = vmand %vm394, %vm506
    %vm523 = vmand %vm395, %vm507
    %vm524 = vmand %vm396, %vm508
    %vm525 = vmand %vm397, %vm509
    %vm526 = vmand %vm398, %vm510
    %vm527 = vmand %vm399, %vm511
    %vm528 = vmand %vm400, %vm512
    %vm529 = vmand %vm401, %vm513
    %vm530 = vmand %vm402, %vm514
    %vm531 = vmand %vm403, %vm515
    %vm532 = vmand %vm404, %vm516
    %vm533 = vmand %vm405, %vm517
    %v534 = vsel %vm518, %v308, -inf
    %v535 = vsel %vm519, %v309, -inf
    %v536 = vsel %vm520, %v310, -inf
    %v537 = vsel %vm521, %v311, -inf
    %v538 = vsel %vm522, %v312, -inf
    %v539 = vsel %vm523, %v313, -inf
    %v540 = vsel %vm524, %v314, -inf
    %v541 = vsel %vm525, %v315, -inf
    %v542 = vsel %vm526, %v316, -inf
    %v543 = vsel %vm527, %v317, -inf
    %v544 = vsel %vm528, %v318, -inf
    %v545 = vsel %vm529, %v319, -inf
    %v546 = vsel %vm530, %v320, -inf
    %v547 = vsel %vm531, %v321, -inf
    %v548 = vsel %vm532, %v322, -inf
    %v549 = vsel %vm533, %v323, -inf
    %vm550 = vmxor %vm422, 1
    %vm551 = vmxor %vm423, 1
    %vm552 = vmxor %vm424, 1
    %vm553 = vmxor %vm425, 1
    %vm554 = vmxor %vm426, 1
    %vm555 = vmxor %vm427, 1
    %vm556 = vmxor %vm428, 1
    %vm557 = vmxor %vm429, 1
    %vm558 = vmxor %vm430, 1
    %vm559 = vmxor %vm431, 1
    %vm560 = vmxor %vm432, 1
    %vm561 = vmxor %vm433, 1
    %vm562 = vmxor %vm434, 1
    %vm563 = vmxor %vm435, 1
    %vm564 = vmxor %vm436, 1
    %vm565 = vmxor %vm437, 1
    %v566 = vsel %vm550, 1, 0
    %v567 = vsel %vm551, 1, 0
    %v568 = vsel %vm552, 1, 0
    %v569 = vsel %vm553, 1, 0
    %v570 = vsel %vm554, 1, 0
    %v571 = vsel %vm555, 1, 0
    %v572 = vsel %vm556, 1, 0
    %v573 = vsel %vm557, 1, 0
    %v574 = vsel %vm558, 1, 0
    %v575 = vsel %vm559, 1, 0
    %v576 = vsel %vm560, 1, 0
    %v577 = vsel %vm561, 1, 0
    %v578 = vsel %vm562, 1, 0
    %v579 = vsel %vm563, 1, 0
    %v580 = vsel %vm564, 1, 0
    %v581 = vsel %vm565, 1, 0
    %582 = vset.pattern.permute.xlu0 0
    %583 = vperm.xlu0 %582, %v566
    %v584 = vpop.permute.xlu0 %583
    %585 = vset.pattern.permute.xlu0 0
    %586 = vperm.xlu0 %585, %v567
    %v587 = vpop.permute.xlu0 %586
    %588 = vset.pattern.permute.xlu0 0
    %589 = vperm.xlu0 %588, %v568
    %v590 = vpop.permute.xlu0 %589
    %591 = vset.pattern.permute.xlu0 0
    %592 = vperm.xlu0 %591, %v569
    %v593 = vpop.permute.xlu0 %592
    %594 = vset.pattern.permute.xlu0 0
    %595 = vperm.xlu0 %594, %v570
    %v596 = vpop.permute.xlu0 %595
    %597 = vset.pattern.permute.xlu0 0
    %598 = vperm.xlu0 %597, %v571
    %v599 = vpop.permute.xlu0 %598
    %600 = vset.pattern.permute.xlu0 0
    %601 = vperm.xlu0 %600, %v572
    %v602 = vpop.permute.xlu0 %601
    %603 = vset.pattern.permute.xlu0 0
    %604 = vperm.xlu0 %603, %v573
    %v605 = vpop.permute.xlu0 %604
    %606 = vset.pattern.permute.xlu0 0
    %607 = vperm.xlu0 %606, %v574
    %v608 = vpop.permute.xlu0 %607
    %609 = vset.pattern.permute.xlu0 0
    %610 = vperm.xlu0 %609, %v575
    %v611 = vpop.permute.xlu0 %610
    %612 = vset.pattern.permute.xlu0 0
    %613 = vperm.xlu0 %612, %v576
    %v614 = vpop.permute.xlu0 %613
    %615 = vset.pattern.permute.xlu0 0
    %616 = vperm.xlu0 %615, %v577
    %v617 = vpop.permute.xlu0 %616
    %618 = vset.pattern.permute.xlu0 0
    %619 = vperm.xlu0 %618, %v578
    %v620 = vpop.permute.xlu0 %619
    %621 = vset.pattern.permute.xlu0 0
    %622 = vperm.xlu0 %621, %v579
    %v623 = vpop.permute.xlu0 %622
    %624 = vset.pattern.permute.xlu0 0
    %625 = vperm.xlu0 %624, %v580
    %v626 = vpop.permute.xlu0 %625
    %627 = vset.pattern.permute.xlu0 0
    %628 = vperm.xlu0 %627, %v581
    %v629 = vpop.permute.xlu0 %628
    %vm630 = vcmp.eq.s32.totalorder %v584, 1
    %vm631 = vcmp.eq.s32.totalorder %v587, 1
    %vm632 = vcmp.eq.s32.totalorder %v590, 1
    %vm633 = vcmp.eq.s32.totalorder %v593, 1
    %vm634 = vcmp.eq.s32.totalorder %v596, 1
    %vm635 = vcmp.eq.s32.totalorder %v599, 1
    %vm636 = vcmp.eq.s32.totalorder %v602, 1
    %vm637 = vcmp.eq.s32.totalorder %v605, 1
    %vm638 = vcmp.eq.s32.totalorder %v608, 1
    %vm639 = vcmp.eq.s32.totalorder %v611, 1
    %vm640 = vcmp.eq.s32.totalorder %v614, 1
    %vm641 = vcmp.eq.s32.totalorder %v617, 1
    %vm642 = vcmp.eq.s32.totalorder %v620, 1
    %vm643 = vcmp.eq.s32.totalorder %v623, 1
    %vm644 = vcmp.eq.s32.totalorder %v626, 1
    %vm645 = vcmp.eq.s32.totalorder %v629, 1
    %vm646 = vmor %vm390, %vm630
    %vm647 = vmor %vm391, %vm631
    %vm648 = vmor %vm392, %vm632
    %vm649 = vmor %vm393, %vm633
    %vm650 = vmor %vm394, %vm634
    %vm651 = vmor %vm395, %vm635
    %vm652 = vmor %vm396, %vm636
    %vm653 = vmor %vm397, %vm637
    %vm654 = vmor %vm398, %vm638
    %vm655 = vmor %vm399, %vm639
    %vm656 = vmor %vm400, %vm640
    %vm657 = vmor %vm401, %vm641
    %vm658 = vmor %vm402, %vm642
    %vm659 = vmor %vm403, %vm643
    %vm660 = vmor %vm404, %vm644
    %vm661 = vmor %vm405, %vm645
    %v662 = vsel %vm646, inf, %v308
    %v663 = vsel %vm647, inf, %v309
    %v664 = vsel %vm648, inf, %v310
    %v665 = vsel %vm649, inf, %v311
    %v666 = vsel %vm650, inf, %v312
    %v667 = vsel %vm651, inf, %v313
    %v668 = vsel %vm652, inf, %v314
    %v669 = vsel %vm653, inf, %v315
    %v670 = vsel %vm654, inf, %v316
    %v671 = vsel %vm655, inf, %v317
    %v672 = vsel %vm656, inf, %v318
    %v673 = vsel %vm657, inf, %v319
    %v674 = vsel %vm658, inf, %v320
    %v675 = vsel %vm659, inf, %v321
    %v676 = vsel %vm660, inf, %v322
    %v677 = vsel %vm661, inf, %v323
    %v678 = vld [vmem:[#allocation2] sm:$0x1]
    %v679 = vmax.f32 %v534, %v538
    %v680 = vmax.f32 %v535, %v539
    %v681 = vmax.f32 %v536, %v540
    %v682 = vmax.f32 %v537, %v541
    %v683 = vmax.f32 %v679, %v542
    %v684 = vmax.f32 %v680, %v543
    %v685 = vmax.f32 %v681, %v544
    %v686 = vmax.f32 %v682, %v545
    %v687 = vmax.f32 %v683, %v546
    %v688 = vmax.f32 %v684, %v547
    %v689 = vmax.f32 %v685, %v548
    %v690 = vmax.f32 %v686, %v549
    %v691 = vmax.f32 %v687, %v688
    %v692 = vmax.f32 %v689, %v690
    %v693 = vmax.f32 %v691, %v692
    %v694 = vrot.slane %v693, 4
    %v695 = vmax.f32 %v693, %v694
    %v696 = vrot.slane %v695, 2
    %v697 = vmax.f32 %v695, %v696
    %v698 = vrot.slane %v697, 1
    %v699 = vmax.f32 %v697, %v698
    %v700 = vmax.f32 %v678, %v699
    %701 = vst [vmem:[#allocation2] sm:$0x1] %v700
    %v702 = vld [vmem:[#allocation3] sm:$0x1]
    %v703 = vmin.f32 %v662, %v666
    %v704 = vmin.f32 %v663, %v667
    %v705 = vmin.f32 %v664, %v668
    %v706 = vmin.f32 %v665, %v669
    %v707 = vmin.f32 %v703, %v670
    %v708 = vmin.f32 %v704, %v671
    %v709 = vmin.f32 %v705, %v672
    %v710 = vmin.f32 %v706, %v673
    %v711 = vmin.f32 %v707, %v674
    %v712 = vmin.f32 %v708, %v675
    %v713 = vmin.f32 %v709, %v676
    %v714 = vmin.f32 %v710, %v677
    %v715 = vmin.f32 %v711, %v712
    %v716 = vmin.f32 %v713, %v714
    %v717 = vmin.f32 %v715, %v716
    %v718 = vrot.slane %v717, 4
    %v719 = vmin.f32 %v717, %v718
    %v720 = vrot.slane %v719, 2
    %v721 = vmin.f32 %v719, %v720
    %v722 = vrot.slane %v721, 1
    %v723 = vmin.f32 %v721, %v722
    %v724 = vmin.f32 %v702, %v723
    %725 = vst [vmem:[#allocation3] sm:$0x1] %v724
    // Predicated region
    $region30: #{tpu_custom_call.1} parent=1 // pred_check
      %p726 = pneg %p28
    $region31: #{tpu_custom_call.1} parent=1 // pred_check_branch
      %728 = sbr.rel (%p726) target = $region33
    $region32: #{tpu_custom_call.1} parent=1 // pred_region
      %v729 = vld [vmem:[%s2] sm:$0x1]
      %v730 = vld [vmem:[#allocation2] sm:$0x1]
      %v731 = vmul.f32 %v730, 2.0
      %v732 = vadd.f32 %v731, %v729
      %v733 = vmax.f32 %v732, 1e-12
      %v734 = vrsqrt.pop %v733
      %v735 = vmul.f32 %v734, %v733
      %v736 = vmul.f32 %v735, %v734
      %v737 = vmul.f32 0.5, %v736
      %v738 = vsub.f32 1.5, %v737
      %v739 = vmul.f32 %v734, %v738
      %v740 = vmul.f32 %v733, %v739
      %vm741 = vcmp.eq.f32.partialorder %v733, inf
      %v742 = vsel %vm741, %v733, %v740
      %vm743 = vcmp.eq.f32.partialorder %v733, 0.0
      %v744 = vand.u32 %v733, 2147483648
      %v745 = vsel %vm743, %v744, %v742
      %v746 = vld [vmem:[#allocation3] sm:$0x1]
      %v747 = vmul.f32 %v746, 2.0
      %v748 = vadd.f32 %v747, %v729
      %v749 = vmax.f32 %v748, 1e-12
      %v750 = vrsqrt.pop %v749
      %v751 = vmul.f32 %v750, %v749
      %v752 = vmul.f32 %v751, %v750
      %v753 = vmul.f32 0.5, %v752
      %v754 = vsub.f32 1.5, %v753
      %v755 = vmul.f32 %v750, %v754
      %v756 = vmul.f32 %v749, %v755
      %vm757 = vcmp.eq.f32.partialorder %v749, inf
      %v758 = vsel %vm757, %v749, %v756
      %vm759 = vcmp.eq.f32.partialorder %v749, 0.0
      %v760 = vand.u32 %v749, 2147483648
      %v761 = vsel %vm759, %v760, %v758
      %762 = vst [vmem:[#allocation4] sm:$0x1] %v745
      %763 = vst [vmem:[#allocation6] sm:$0x1] %v761
      %v764 = vsub.f32 %v745, %v761
      %v765 = vmax.f32 %v764, 0.0
      %v766 = vand.u32 2147483647, %v764
      %v767 = vsub.f32 0.0, %v766
      %v768 = vmul.f32 %v767, 1.442695
      %v769 = vpow.pop %v768
      %v770 = vadd.f32 %v769, 1.0
      %v771 = vlog2.pop %v770
      %v772 = vmul.f32 %v771, 0.6931472
      %v773 = vmul.f32 -0.5, %v769
      %v774 = vadd.f32 %v773, 1.0
      %v775 = vmul.f32 %v774, %v769
      %v776 = vand.u32 2147483647, %v769
      %vm777 = vcmp.lt.f32.partialorder %v776, 0.0004427343
      %v778 = vsel %vm777, %v775, %v772
      %v779 = vadd.f32 %v765, %v778
      %780 = vst [vmem:[#allocation8] sm:$0x1] %v779
    $region33: #{tpu_custom_call.1} parent=1 // pred_fallthru
      _
    // Predicated region
    $region34: #{tpu_custom_call.1} parent=1 // pred_check
      _
    $region35: #{tpu_custom_call.1} parent=1 // pred_check_branch
      %782 = sbr.rel (0) target = $region37
    $region36: #{tpu_custom_call.1} parent=1 // pred_region
      %784 = vsyncadd [#allocation5], 0
      %s786 = sshll.u32 [#allocation4], 4
      %s787 = int_to_ptr.vmem [resolvable:$true] %s786
      %s788 = sshll.u32 %s6, 4
      %s789 = int_to_ptr.hbm [resolvable:$true] %s788
      %791 = dma.vmem_to_hbm [thread:$0]  %s787, 16, %s789, [#allocation5]
    $region37: #{tpu_custom_call.1} parent=1 // pred_fallthru
      _
    // Predicated region
    $region38: #{tpu_custom_call.1} parent=1 // pred_check
      _
    $region39: #{tpu_custom_call.1} parent=1 // pred_check_branch
      %793 = sbr.rel (0) target = $region41
    $region40: #{tpu_custom_call.1} parent=1 // pred_region
      %795 = vsyncadd [#allocation7], 0
      %s797 = sshll.u32 [#allocation6], 4
      %s798 = int_to_ptr.vmem [resolvable:$true] %s797
      %s799 = sshll.u32 %s7, 4
      %s800 = int_to_ptr.hbm [resolvable:$true] %s799
      %802 = dma.vmem_to_hbm [thread:$0]  %s798, 16, %s800, [#allocation7]
    $region41: #{tpu_custom_call.1} parent=1 // pred_fallthru
      _
    // Predicated region
    $region42: #{tpu_custom_call.1} parent=1 // pred_check
      _
    $region43: #{tpu_custom_call.1} parent=1 // pred_check_branch
      %804 = sbr.rel (0) target = $region45
    $region44: #{tpu_custom_call.1} parent=1 // pred_region
      %806 = vsyncadd [#allocation7], 0
      %s808 = sshll.u32 [#allocation8], 4
      %s809 = int_to_ptr.vmem [resolvable:$true] %s808
      %s810 = sshll.u32 %s8, 4
      %s811 = int_to_ptr.hbm [resolvable:$true] %s810
      %813 = dma.vmem_to_hbm [thread:$0]  %s809, 16, %s811, [#allocation7]
    $region45: #{tpu_custom_call.1} parent=1 // pred_fallthru
      _
    // Predicated region
    $region46: #{tpu_custom_call.1} parent=1 // pred_check
      _
    $region47: #{tpu_custom_call.1} parent=1 // pred_check_branch
      %815 = sbr.rel (0) target = $region49
    $region48: #{tpu_custom_call.1} parent=1 // pred_region
      %817 = dma.done [#allocation5], 16
    $region49: #{tpu_custom_call.1} parent=1 // pred_fallthru
      _
    // Predicated region
    $region50: #{tpu_custom_call.1} parent=1 // pred_check
      _
    $region51: #{tpu_custom_call.1} parent=1 // pred_check_branch
      %819 = sbr.rel (0) target = $region53
    $region52: #{tpu_custom_call.1} parent=1 // pred_region
      %821 = dma.done [#allocation7], 16
    $region53: #{tpu_custom_call.1} parent=1 // pred_fallthru
      _
    // Predicated region
    $region54: #{tpu_custom_call.1} parent=1 // pred_check
      _
    $region55: #{tpu_custom_call.1} parent=1 // pred_check_branch
      %823 = sbr.rel (0) target = $region57
    $region56: #{tpu_custom_call.1} parent=1 // pred_region
      %825 = dma.done [#allocation7], 16
    $region57: #{tpu_custom_call.1} parent=1 // pred_fallthru
      _
    %826 = vsyncpa [#allocation5], 1
    %827 = vsyncpa [#allocation7], 1

</llo_original>
